<compile_context>
chip_gen: v7x
topology: tpu7x:2x2x1
jax: 0.10.0
libtpu: 0.0.40
codegen_flags: <defaults>
</compile_context>

<pallas_src>
import functools

import jax
import jax.numpy as jnp
from jax.experimental import pallas as pl
from jax.experimental.pallas import tpu as pltpu


# ----------------------------------------------------------------------------
# Stage 1: K/V projection — runs exactly once per (batch, seq-tile).
# ----------------------------------------------------------------------------
def _kv_proj_kernel(x_ref, wk_ref, bk_ref, wv_ref, bv_ref, k_ref, v_ref, *, n_heads):
    _, ts, d_model = x_ref.shape
    d_head = d_model // n_heads
    xt = x_ref[0]                                                    # (TS, D) bf16
    k = (jnp.dot(xt, wk_ref[...], preferred_element_type=jnp.float32)
         + bk_ref[...]).astype(jnp.bfloat16)
    v = (jnp.dot(xt, wv_ref[...], preferred_element_type=jnp.float32)
         + bv_ref[...]).astype(jnp.bfloat16)
    # Head-split relayout happens exactly once per sequence element (not per q-tile).
    k_ref[0] = jnp.transpose(k.reshape(ts, n_heads, d_head), (1, 0, 2))  # (H, TS, dh)
    v_ref[0] = jnp.transpose(v.reshape(ts, n_heads, d_head), (1, 0, 2))


# ----------------------------------------------------------------------------
# Stage 2: flash attention over pre-projected head-major K/V + fused Q / output
# projections.
# ----------------------------------------------------------------------------
def _mha_flash_kernel(xq_ref, kh_ref, vh_ref, wq_ref, bq_ref, wo_ref, bo_ref,
                      o_ref, q_scr, m_scr, l_scr, acc_scr, *, n_heads):
    ki = pl.program_id(2)
    _, tq, d_model = xq_ref.shape
    d_head = d_model // n_heads

    # ---- per (batch, q-tile) init: fused Q projection (pre-scaled), reset state.
    @pl.when(ki == 0)
    def _():
        xq = xq_ref[0]                                               # (TQ, D) bf16
        q = jnp.dot(xq, wq_ref[...], preferred_element_type=jnp.float32) + bq_ref[...]
        q_scr[...] = jnp.transpose(
            q.reshape(tq, n_heads, d_head), (1, 0, 2)).astype(q_scr.dtype)  # (H,TQ,dh)
        m_scr[...] = jnp.full(m_scr.shape, -jnp.inf, m_scr.dtype)
        l_scr[...] = jnp.zeros(l_scr.shape, l_scr.dtype)
        acc_scr[...] = jnp.zeros(acc_scr.shape, acc_scr.dtype)

    kh = kh_ref[0]                                                   # (H, TK, dh) bf16
    vh = vh_ref[0]                                                   # (H, TK, dh) bf16

    # ---- scores: contraction on the last dim of both operands (no explicit k.T).
    s = jnp.einsum('hqd,hkd->hqk', q_scr[...], kh,
                   preferred_element_type=jnp.float32)               # (H, TQ, TK)

    # ---- online (flash) softmax accumulation.
    m_prev = m_scr[...]
    m_new = jnp.maximum(m_prev, jnp.max(s, axis=-1, keepdims=True))
    alpha = jnp.exp(m_prev - m_new)
    p = jnp.exp(s - m_new)
    l_scr[...] = alpha * l_scr[...] + jnp.sum(p, axis=-1, keepdims=True)
    acc_scr[...] = alpha * acc_scr[...] + jnp.einsum(
        'hqk,hkd->hqd', p.astype(jnp.bfloat16), vh,
        preferred_element_type=jnp.float32)
    m_scr[...] = m_new

    # ---- finalize: normalize, merge heads, fused output projection.
    @pl.when(ki == pl.num_programs(2) - 1)
    def _():
        o = acc_scr[...] * pl.reciprocal(l_scr[...], approx=True)    # (H, TQ, dh)
        concat = jnp.transpose(o, (1, 0, 2)).reshape(tq, d_model).astype(jnp.bfloat16)
        out = (jnp.dot(concat, wo_ref[...], preferred_element_type=jnp.float32)
               + bo_ref[...])
        o_ref[0] = out.astype(o_ref.dtype)


# ----------------------------------------------------------------------------
# Host-side helpers.
# ----------------------------------------------------------------------------
def _fuse_heads(w, b, scale=1.0):
    """(H, D, dh), (H, 1, dh) -> (D, H*dh), (1, H*dh) (head h -> cols h*dh:(h+1)*dh)."""
    H, D, dh = w.shape
    w_f = jnp.transpose(w, (1, 0, 2)).reshape(D, H * dh) * scale
    b_f = jnp.transpose(b, (1, 0, 2)).reshape(1, H * dh) * scale
    return w_f, b_f


def _pad(n, m):
    return -(-n // m) * m


def _vmem_limit_bytes(*byte_terms):
    est = int(1.5 * sum(byte_terms))        # 50% headroom for compiler temporaries
    return max(32 * 1024 * 1024, min(est, 100 * 1024 * 1024))


def multi_head_attention(x, params, *, n_heads, q_tile=256, kv_tile=256):
    """x: (B, S, D) float32.  params: dict of per-head stacked weights (see init_params)."""
    B, S, D = x.shape
    assert D % n_heads == 0
    d_head = D // n_heads
    TQ = min(q_tile, S)
    TK = min(kv_tile, S)
    assert S % TQ == 0 and S % TK == 0, "sequence length must divide the tile sizes"

    scale = 1.0 / float(d_head) ** 0.5      # fold 1/sqrt(d_head) into Q projection
    wq, bq = _fuse_heads(params["wq"], params["bq"], scale)
    wk, bk = _fuse_heads(params["wk"], params["bk"])
    wv, bv = _fuse_heads(params["wv"], params["bv"])
    wo, bo = params["wo"], params["bo"]

    # bf16 operands for the MXU; biases stay f32 (added to f32 accumulators).
    xb = x.astype(jnp.bfloat16)
    wq, wk, wv, wo = (w.astype(jnp.bfloat16) for w in (wq, wk, wv, wo))

    # ---------------- Stage 1: K/V projection to head-major (B, H, S, dh) bf16.
    proj_vmem = _vmem_limit_bytes(
        2 * TK * D * 2,                                             # x tile (x2 bufs)
        2 * 2 * D * D * 2,                                          # wk, wv
        2 * 2 * 8 * _pad(D, 128) * 4,                               # bk, bv
        2 * 2 * n_heads * _pad(TK, 8) * _pad(d_head, 128) * 2,      # k/v out tiles
    )
    kv_kernel = functools.partial(_kv_proj_kernel, n_heads=n_heads)
    kh, vh = pl.pallas_call(
        kv_kernel,
        out_shape=(jax.ShapeDtypeStruct((B, n_heads, S, d_head), jnp.bfloat16),
                   jax.ShapeDtypeStruct((B, n_heads, S, d_head), jnp.bfloat16)),
        grid_spec=pltpu.PrefetchScalarGridSpec(
            num_scalar_prefetch=0,
            grid=(B, S // TK),
            in_specs=[
                pl.BlockSpec((1, TK, D), lambda b, si: (b, si, 0)),     # x
                pl.BlockSpec((D, D), lambda b, si: (0, 0)),             # wk
                pl.BlockSpec((1, D), lambda b, si: (0, 0)),             # bk
                pl.BlockSpec((D, D), lambda b, si: (0, 0)),             # wv
                pl.BlockSpec((1, D), lambda b, si: (0, 0)),             # bv
            ],
            out_specs=[
                pl.BlockSpec((1, n_heads, TK, d_head), lambda b, si: (b, 0, si, 0)),
                pl.BlockSpec((1, n_heads, TK, d_head), lambda b, si: (b, 0, si, 0)),
            ],
        ),
        compiler_params=pltpu.CompilerParams(
            dimension_semantics=("parallel", "parallel"),
            vmem_limit_bytes=proj_vmem),
    )(xb, wk, bk, wv, bv)

    # ---------------- Stage 2: flash attention + fused Q / output projections.
    attn_vmem = _vmem_limit_bytes(
        2 * TQ * D * 2,                                             # xq tile
        2 * 2 * n_heads * _pad(TK, 8) * _pad(d_head, 128) * 2,      # kh, vh tiles
        2 * 2 * D * D * 2,                                          # wq, wo
        2 * 2 * 8 * _pad(D, 128) * 4,                               # bq, bo
        2 * TQ * D * 4,                                             # output tile (f32)
        n_heads * _pad(TQ, 8) * _pad(d_head, 128) * 2,              # q_scr
        2 * n_heads * _pad(TQ, 8) * 128 * 4,                        # m, l
        n_heads * _pad(TQ, 8) * _pad(d_head, 128) * 4,              # acc
    )
    const = lambda shape: pl.BlockSpec(shape, lambda b, qi, ki: (0,) * len(shape))
    attn_kernel = functools.partial(_mha_flash_kernel, n_heads=n_heads)
    return pl.pallas_call(
        attn_kernel,
        out_shape=jax.ShapeDtypeStruct((B, S, D), x.dtype),
        grid_spec=pltpu.PrefetchScalarGridSpec(
            num_scalar_prefetch=0,
            grid=(B, S // TQ, S // TK),
            in_specs=[
                pl.BlockSpec((1, TQ, D), lambda b, qi, ki: (b, qi, 0)),             # x (queries)
                pl.BlockSpec((1, n_heads, TK, d_head), lambda b, qi, ki: (b, 0, ki, 0)),  # K
                pl.BlockSpec((1, n_heads, TK, d_head), lambda b, qi, ki: (b, 0, ki, 0)),  # V
                const((D, D)), const((1, D)),    # wq, bq (pre-scaled)
                const((D, D)), const((1, D)),    # wo, bo
            ],
            out_specs=pl.BlockSpec((1, TQ, D), lambda b, qi, ki: (b, qi, 0)),
            scratch_shapes=[
                pltpu.VMEM((n_heads, TQ, d_head), jnp.bfloat16),   # cached Q (head-major)
                pltpu.VMEM((n_heads, TQ, 1), jnp.float32),         # running max m
                pltpu.VMEM((n_heads, TQ, 1), jnp.float32),         # running sum l
                pltpu.VMEM((n_heads, TQ, d_head), jnp.float32),    # PV accumulator
            ],
        ),
        compiler_params=pltpu.CompilerParams(
            dimension_semantics=("parallel", "parallel", "arbitrary"),
            vmem_limit_bytes=attn_vmem),
    )(xb, kh, vh, wq, bq, wo, bo)


def init_params(key, d_model, n_heads):
    d_head = d_model // n_heads
    ks = jax.random.split(key, 8)
    s = 0.1
    return {
        "wq": s * jax.random.normal(ks[0], (n_heads, d_model, d_head), jnp.float32),
        "bq": s * jax.random.normal(ks[1], (n_heads, 1, d_head), jnp.float32),
        "wk": s * jax.random.normal(ks[2], (n_heads, d_model, d_head), jnp.float32),
        "bk": s * jax.random.normal(ks[3], (n_heads, 1, d_head), jnp.float32),
        "wv": s * jax.random.normal(ks[4], (n_heads, d_model, d_head), jnp.float32),
        "bv": s * jax.random.normal(ks[5], (n_heads, 1, d_head), jnp.float32),
        "wo": s * jax.random.normal(ks[6], (d_model, d_model), jnp.float32),
        "bo": s * jax.random.normal(ks[7], (1, d_model), jnp.float32),
    }


def reference_mha(x, params, *, n_heads):
    """Pure-JAX (f32) mirror of the PyTorch forward pass for verification."""
    B, S, D = x.shape
    d_head = D // n_heads
    scale = float(d_head) ** 0.5
    heads = []
    for h in range(n_heads):
        q = x @ params["wq"][h] + params["bq"][h]
        k = x @ params["wk"][h] + params["bk"][h]
        v = x @ params["wv"][h] + params["bv"][h]
        scores = jnp.einsum("bqd,bkd->bqk", q, k)
        attn = jax.nn.softmax(scores / scale, axis=-1)
        heads.append(jnp.einsum("bqk,bkd->bqd", attn, v))
    concat = jnp.concatenate(heads, axis=-1)
    return concat @ params["wo"] + params["bo"]


if __name__ == "__main__":
    B, S, d_model, n_heads = 2, 32, 32, 4

    key = jax.random.PRNGKey(0)
    kx, kp = jax.random.split(key)
    x = jax.random.normal(kx, (B, S, d_model), jnp.float32)
    params = init_params(kp, d_model, n_heads)

    # Small tiles here so the grid is (B, 2, 2) and the multi-KV-tile online-softmax
    # path is actually exercised at these toy shapes (defaults are 256 for real shapes).
    out = multi_head_attention(x, params, n_heads=n_heads, q_tile=16, kv_tile=16)
    out = jax.block_until_ready(out)

    ref = reference_mha(x, params, n_heads=n_heads)
    assert out.shape == (B, S, d_model)
    # bf16 matmul inputs + approx reciprocal -> looser tolerance than pure f32.
    assert jnp.allclose(out, ref, atol=5e-2, rtol=5e-2), "mismatch vs reference"

    print("KERNEL_OK")
</pallas_src>

<mosaic_0001>
module attributes {stable_mosaic.version = 11 : i64} {
  func.func @_kv_proj_kernel(%arg0: i32, %arg1: i32, %arg2: memref<1x16x32xbf16, #tpu.memory_space<vmem>>, %arg3: memref<32x32xbf16, #tpu.memory_space<vmem>>, %arg4: memref<1x32xf32, #tpu.memory_space<vmem>>, %arg5: memref<32x32xbf16, #tpu.memory_space<vmem>>, %arg6: memref<1x32xf32, #tpu.memory_space<vmem>>, %arg7: memref<1x4x16x8xbf16, #tpu.memory_space<vmem>>, %arg8: memref<1x4x16x8xbf16, #tpu.memory_space<vmem>>) attributes {dimension_semantics = [#tpu.dimension_semantics<parallel>, #tpu.dimension_semantics<parallel>], iteration_bounds = array<i64: 2, 2>, scalar_prefetch = 0 : i64, scratch_operands = 0 : i64, tpu.core_type = #tpu.core_type<tc>, window_params = [{transform_indices = @transform_0, window_bounds = array<i64: 1, 16, 32>}, {pipeline_mode = #tpu.pipeline_mode<synchronous>, transform_indices = @transform_1, window_bounds = array<i64: 32, 32>}, {pipeline_mode = #tpu.pipeline_mode<synchronous>, transform_indices = @transform_2, window_bounds = array<i64: 1, 32>}, {pipeline_mode = #tpu.pipeline_mode<synchronous>, transform_indices = @transform_3, window_bounds = array<i64: 32, 32>}, {pipeline_mode = #tpu.pipeline_mode<synchronous>, transform_indices = @transform_4, window_bounds = array<i64: 1, 32>}, {transform_indices = @transform_5, window_bounds = array<i64: 1, 4, 16, 8>}, {transform_indices = @transform_6, window_bounds = array<i64: 1, 4, 16, 8>}]} {
    %c0 = arith.constant 0 : index
    %c0_0 = arith.constant 0 : index
    %c0_1 = arith.constant 0 : index
    %0 = vector.load %arg2[%c0, %c0_0, %c0_1] : memref<1x16x32xbf16, #tpu.memory_space<vmem>>, vector<1x16x32xbf16>
    %1 = vector.shape_cast %0 : vector<1x16x32xbf16> to vector<16x32xbf16>
    %c0_2 = arith.constant 0 : index
    %c0_3 = arith.constant 0 : index
    %2 = vector.load %arg3[%c0_2, %c0_3] : memref<32x32xbf16, #tpu.memory_space<vmem>>, vector<32x32xbf16>
    %cst = arith.constant dense<0.000000e+00> : vector<16x32xf32>
    %3 = tpu.matmul %1, %2, %cst {dimension_numbers = #tpu.dot_dimension_numbers<[1], [0], [0], [1], [0, 0, 1, 1], [], []>} : vector<16x32xbf16>, vector<32x32xbf16>, vector<16x32xf32> -> vector<16x32xf32>
    %c0_4 = arith.constant 0 : index
    %c0_5 = arith.constant 0 : index
    %4 = vector.load %arg4[%c0_4, %c0_5] : memref<1x32xf32, #tpu.memory_space<vmem>>, vector<1x32xf32>
    %5 = vector.broadcast %4 : vector<1x32xf32> to vector<16x32xf32>
    %6 = arith.addf %3, %5 : vector<16x32xf32>
    %7 = arith.truncf %6 : vector<16x32xf32> to vector<16x32xbf16>
    %c0_6 = arith.constant 0 : index
    %c0_7 = arith.constant 0 : index
    %8 = vector.load %arg5[%c0_6, %c0_7] : memref<32x32xbf16, #tpu.memory_space<vmem>>, vector<32x32xbf16>
    %cst_8 = arith.constant dense<0.000000e+00> : vector<16x32xf32>
    %9 = tpu.matmul %1, %8, %cst_8 {dimension_numbers = #tpu.dot_dimension_numbers<[1], [0], [0], [1], [0, 0, 1, 1], [], []>} : vector<16x32xbf16>, vector<32x32xbf16>, vector<16x32xf32> -> vector<16x32xf32>
    %c0_9 = arith.constant 0 : index
    %c0_10 = arith.constant 0 : index
    %10 = vector.load %arg6[%c0_9, %c0_10] : memref<1x32xf32, #tpu.memory_space<vmem>>, vector<1x32xf32>
    %11 = vector.broadcast %10 : vector<1x32xf32> to vector<16x32xf32>
    %12 = arith.addf %9, %11 : vector<16x32xf32>
    %13 = arith.truncf %12 : vector<16x32xf32> to vector<16x32xbf16>
    %14 = vector.shape_cast %7 : vector<16x32xbf16> to vector<16x4x8xbf16>
    %15 = tpu.transpose %14, [1, 0, 2] : vector<16x4x8xbf16> -> vector<4x16x8xbf16>
    %c0_11 = arith.constant 0 : index
    %c0_12 = arith.constant 0 : index
    %c0_13 = arith.constant 0 : index
    %c0_14 = arith.constant 0 : index
    %16 = vector.load %arg7[%c0_11, %c0_12, %c0_13, %c0_14] : memref<1x4x16x8xbf16, #tpu.memory_space<vmem>>, vector<1x4x16x8xbf16>
    %17 = vector.shape_cast %16 : vector<1x4x16x8xbf16> to vector<4x16x8xbf16>
    %18 = vector.shape_cast %15 : vector<4x16x8xbf16> to vector<1x4x16x8xbf16>
    tpu.vector_store %arg7[%c0_11, %c0_12, %c0_13, %c0_14], %18 {strides = array<i32>} : memref<1x4x16x8xbf16, #tpu.memory_space<vmem>>, vector<1x4x16x8xbf16>,
    %19 = vector.shape_cast %13 : vector<16x32xbf16> to vector<16x4x8xbf16>
    %20 = tpu.transpose %19, [1, 0, 2] : vector<16x4x8xbf16> -> vector<4x16x8xbf16>
    %c0_15 = arith.constant 0 : index
    %c0_16 = arith.constant 0 : index
    %c0_17 = arith.constant 0 : index
    %c0_18 = arith.constant 0 : index
    %21 = vector.load %arg8[%c0_15, %c0_16, %c0_17, %c0_18] : memref<1x4x16x8xbf16, #tpu.memory_space<vmem>>, vector<1x4x16x8xbf16>
    %22 = vector.shape_cast %21 : vector<1x4x16x8xbf16> to vector<4x16x8xbf16>
    %23 = vector.shape_cast %20 : vector<4x16x8xbf16> to vector<1x4x16x8xbf16>
    tpu.vector_store %arg8[%c0_15, %c0_16, %c0_17, %c0_18], %23 {strides = array<i32>} : memref<1x4x16x8xbf16, #tpu.memory_space<vmem>>, vector<1x4x16x8xbf16>,
    return
  }
  func.func @transform_0(%arg0: i32, %arg1: i32) -> (i32, i32, i32) {
    %c0_i32 = arith.constant 0 : i32
    %c0_i32_0 = arith.constant 0 : i32
    return %arg0, %arg1, %c0_i32 : i32, i32, i32
  }
  func.func @transform_1(%arg0: i32, %arg1: i32) -> (i32, i32) {
    %c0_i32 = arith.constant 0 : i32
    %c0_i32_0 = arith.constant 0 : i32
    %c0_i32_1 = arith.constant 0 : i32
    return %c0_i32, %c0_i32_0 : i32, i32
  }
  func.func @transform_2(%arg0: i32, %arg1: i32) -> (i32, i32) {
    %c0_i32 = arith.constant 0 : i32
    %c0_i32_0 = arith.constant 0 : i32
    %c0_i32_1 = arith.constant 0 : i32
    return %c0_i32, %c0_i32_0 : i32, i32
  }
  func.func @transform_3(%arg0: i32, %arg1: i32) -> (i32, i32) {
    %c0_i32 = arith.constant 0 : i32
    %c0_i32_0 = arith.constant 0 : i32
    %c0_i32_1 = arith.constant 0 : i32
    return %c0_i32, %c0_i32_0 : i32, i32
  }
  func.func @transform_4(%arg0: i32, %arg1: i32) -> (i32, i32) {
    %c0_i32 = arith.constant 0 : i32
    %c0_i32_0 = arith.constant 0 : i32
    %c0_i32_1 = arith.constant 0 : i32
    return %c0_i32, %c0_i32_0 : i32, i32
  }
  func.func @transform_5(%arg0: i32, %arg1: i32) -> (i32, i32, i32, i32) {
    %c0_i32 = arith.constant 0 : i32
    %c0_i32_0 = arith.constant 0 : i32
    %c0_i32_1 = arith.constant 0 : i32
    return %arg0, %c0_i32, %arg1, %c0_i32_0 : i32, i32, i32, i32
  }
  func.func @transform_6(%arg0: i32, %arg1: i32) -> (i32, i32, i32, i32) {
    %c0_i32 = arith.constant 0 : i32
    %c0_i32_0 = arith.constant 0 : i32
    %c0_i32_1 = arith.constant 0 : i32
    return %arg0, %c0_i32, %arg1, %c0_i32_0 : i32, i32, i32, i32
  }
}

</mosaic_0001>

<llo_original>
// kernel: tpu_custom_call.1
$region0: #{tpu_custom_call.1}
  #allocation0 [shape = 'u32[]', space=smem, size = 0x4, offset = 0x4, fixed_abs, tag = 'smem constant byte address 0x4 - core index']
  #allocation1 [shape = 'u32[144,128]{1,0:T(1,128)}', space=vmem, size = 0x12000, scoped, tag = 'internal scratch']
  %s0 = inlined_call_operand.hbm [shape: bf16[2,32,32], index: 0, kind: input, shape index: {}]
  %s1 = inlined_call_operand.hbm [shape: bf16[32,32], index: 1, kind: input, shape index: {}]
  %s2 = inlined_call_operand.vmem [shape: f32[1,32], index: 2, kind: input, shape index: {}]
  %s3 = inlined_call_operand.hbm [shape: bf16[32,32], index: 3, kind: input, shape index: {}]
  %s4 = inlined_call_operand.vmem [shape: f32[1,32], index: 4, kind: input, shape index: {}]
  %s5 = inlined_call_operand.vmem [shape: bf16[2,4,32,8], index: 5, kind: output, shape index: {0}]
  %s6 = inlined_call_operand.vmem [shape: bf16[2,4,32,8], index: 6, kind: output, shape index: {1}]
  %7 = xla_tuple %s5, %s6
  %s8 = sld [smem:[#allocation0]]
  $region147: #{tpu_custom_call.1} parent=0
    _
  %s10 = ssub.s32 1, %s8
  %s11 = scalar_select 0, %s10, %s8
  $region1: #{tpu_custom_call.1} parent=0
    #allocation2 [shape = 'u8[8192]{0}', space=vmem, size = 0x2000, scoped, tag = 'input window, operand 0']
    #allocation3 [shape = 's32[2]{0}', space=sflag, size = 0x8, scoped, tag = 'scoped memory for tpu_custom_call.1']
    #allocation4 [shape = 'u8[8192]{0}', space=vmem, size = 0x2000, scoped, tag = 'input window, operand 1, single buffered']
    #allocation5 [shape = 's32[1]{0}', space=sflag, size = 0x4, scoped, tag = 'scoped memory for tpu_custom_call.1']
    #allocation6 [shape = 'u8[8192]{0}', space=vmem, size = 0x2000, scoped, tag = 'input window, operand 3, single buffered']
    #allocation7 [shape = 'u8[32768]{0}', space=vmem, size = 0x8000, scoped, tag = 'output window, operand 0']
    #allocation8 [shape = 'u8[32768]{0}', space=vmem, size = 0x8000, scoped, tag = 'output window, operand 1']
    %12 = vsyncpa [#allocation3], 0
    %s13 = scalar_lea.sflag [#allocation3], 1
    %14 = vsyncpa %s13, 0
    %15 = vsyncpa [#allocation5], 0
    loop: start=0, step=1, limit=6
    $region2: #{tpu_custom_call.1} parent=1 // loop_pre_header
      _
    $region3: #{tpu_custom_call.1} parent=1 // loop_header
      %s17 = sphi 0, %s21
      %p18 = scmp.ge.s32.totalorder %s17, 6
      %s24 = sphi 0, %s36
      %s25 = sphi 0, %s32
      %s26 = sphi 0, %s24
      %s27 = sphi 0, %s25
      %s28 = sphi 0, %s26
      %s29 = sphi 0, %s27
      %s41 = sphi 0, %s43
      %s44 = sphi 0, %s41
      %s45 = sphi 0, %s44
      %s61 = sphi 0, %s45
      %s65 = sphi 0, %s65
      %s67 = sphi 0, %s65
      %s68 = sphi 0, %s67
      %s82 = sphi 0, %s68
      %s86 = sphi 0, %s86
      %s88 = sphi 0, %s86
      %s89 = sphi 0, %s88
      %s103 = sphi 0, %s89
      %s107 = sphi 0, %s107
      %s109 = sphi 0, %s107
      %s110 = sphi 0, %s109
      %s124 = sphi 0, %s110
      %s128 = sphi 0, %s128
      %s130 = sphi 0, %s128
      %s131 = sphi 0, %s130
      %s145 = sphi 0, %s131
      %s153 = sphi 0, %s155
      %s156 = sphi 0, %s153
      %s157 = sphi 0, %s156
      %s173 = sphi 0, %s157
      %s181 = sphi 0, %s183
      %s184 = sphi 0, %s181
      %s185 = sphi 0, %s184
      %s201 = sphi 0, %s185
    $region4: #{tpu_custom_call.1} parent=1 // loop_header_branch
      %20 = sbr.rel (%p18) target = $region8
    $region5: #{tpu_custom_call.1} parent=1 // loop_body
      %s22 = ssub.s32 %s17, 1
      %s23 = ssub.s32 %s17, 2
      %s30 = sadd.s32 1, %s25
      %p31 = scmp.ge.s32.totalorder %s30, 2
      %s32 = scalar_select %p31, 0, %s30
      %s33 = sadd.s32 1, %s24
      %s34 = scalar_select %p31, %s33, %s24
      %p35 = scmp.ge.s32.totalorder %s34, 2
      %s36 = scalar_select %p35, 0, %s34
      %s37 = ssub.s32 %s24, %s36
      %s38 = ssub.s32 %s25, %s32
      %s39 = sor.u32 %s37, %s38
      %p40 = scmp.eq.s32.totalorder %s39, 0
      %s42 = sadd.s32 %s41, 1
      %s43 = scalar_select %p40, %s41, %s42
      %p46 = pneg %p40
      %p47 = scmp.eq.s32.totalorder %s17, 3
      %p48 = por %p46, %p47
      %p49 = scmp.ne.s32.totalorder %s41, %s44
      %p50 = scmp.eq.s32.totalorder %s17, 0
      %p51 = por %p49, %p50
      %p52 = scmp.ne.s32.totalorder %s41, %s44
      %p53 = scmp.eq.s32.totalorder %s22, 3
      %p54 = por %p52, %p53
      %p55 = scmp.ne.s32.totalorder %s44, %s45
      %p56 = scmp.eq.s32.totalorder %s22, 0
      %p57 = por %p55, %p56
      %p58 = scmp.ne.s32.totalorder %s44, %s45
      %p59 = scmp.eq.s32.totalorder %s23, 3
      %p60 = por %p58, %p59
      %p62 = scmp.ne.s32.totalorder %s45, %s61
      %p63 = scmp.eq.s32.totalorder %s23, 0
      %p64 = por %p62, %p63
      %s66 = sadd.s32 %s65, 1
      %p69 = scmp.eq.s32.totalorder %s17, 3
      %p70 = scmp.ne.s32.totalorder %s65, %s67
      %p71 = scmp.eq.s32.totalorder %s17, 0
      %p72 = por %p70, %p71
      %p73 = scmp.ne.s32.totalorder %s65, %s67
      %p74 = scmp.eq.s32.totalorder %s22, 3
      %p75 = por %p73, %p74
      %p76 = scmp.ne.s32.totalorder %s67, %s68
      %p77 = scmp.eq.s32.totalorder %s22, 0
      %p78 = por %p76, %p77
      %p79 = scmp.ne.s32.totalorder %s67, %s68
      %p80 = scmp.eq.s32.totalorder %s23, 3
      %p81 = por %p79, %p80
      %p83 = scmp.ne.s32.totalorder %s68, %s82
      %p84 = scmp.eq.s32.totalorder %s23, 0
      %p85 = por %p83, %p84
      %s87 = sadd.s32 %s86, 1
      %p90 = scmp.eq.s32.totalorder %s17, 3
      %p91 = scmp.ne.s32.totalorder %s86, %s88
      %p92 = scmp.eq.s32.totalorder %s17, 0
      %p93 = por %p91, %p92
      %p94 = scmp.ne.s32.totalorder %s86, %s88
      %p95 = scmp.eq.s32.totalorder %s22, 3
      %p96 = por %p94, %p95
      %p97 = scmp.ne.s32.totalorder %s88, %s89
      %p98 = scmp.eq.s32.totalorder %s22, 0
      %p99 = por %p97, %p98
      %p100 = scmp.ne.s32.totalorder %s88, %s89
      %p101 = scmp.eq.s32.totalorder %s23, 3
      %p102 = por %p100, %p101
      %p104 = scmp.ne.s32.totalorder %s89, %s103
      %p105 = scmp.eq.s32.totalorder %s23, 0
      %p106 = por %p104, %p105
      %s108 = sadd.s32 %s107, 1
      %p111 = scmp.eq.s32.totalorder %s17, 3
      %p112 = scmp.ne.s32.totalorder %s107, %s109
      %p113 = scmp.eq.s32.totalorder %s17, 0
      %p114 = por %p112, %p113
      %p115 = scmp.ne.s32.totalorder %s107, %s109
      %p116 = scmp.eq.s32.totalorder %s22, 3
      %p117 = por %p115, %p116
      %p118 = scmp.ne.s32.totalorder %s109, %s110
      %p119 = scmp.eq.s32.totalorder %s22, 0
      %p120 = por %p118, %p119
      %p121 = scmp.ne.s32.totalorder %s109, %s110
      %p122 = scmp.eq.s32.totalorder %s23, 3
      %p123 = por %p121, %p122
      %p125 = scmp.ne.s32.totalorder %s110, %s124
      %p126 = scmp.eq.s32.totalorder %s23, 0
      %p127 = por %p125, %p126
      %s129 = sadd.s32 %s128, 1
      %p132 = scmp.eq.s32.totalorder %s17, 3
      %p133 = scmp.ne.s32.totalorder %s128, %s130
      %p134 = scmp.eq.s32.totalorder %s17, 0
      %p135 = por %p133, %p134
      %p136 = scmp.ne.s32.totalorder %s128, %s130
      %p137 = scmp.eq.s32.totalorder %s22, 3
      %p138 = por %p136, %p137
      %p139 = scmp.ne.s32.totalorder %s130, %s131
      %p140 = scmp.eq.s32.totalorder %s22, 0
      %p141 = por %p139, %p140
      %p142 = scmp.ne.s32.totalorder %s130, %s131
      %p143 = scmp.eq.s32.totalorder %s23, 3
      %p144 = por %p142, %p143
      %p146 = scmp.ne.s32.totalorder %s131, %s145
      %p147 = scmp.eq.s32.totalorder %s23, 0
      %p148 = por %p146, %p147
      %s149 = ssub.s32 %s24, %s36
      %s150 = ssub.s32 %s25, %s32
      %s151 = sor.u32 %s149, %s150
      %p152 = scmp.eq.s32.totalorder %s151, 0
      %s154 = sadd.s32 %s153, 1
      %s155 = scalar_select %p152, %s153, %s154
      %p158 = pneg %p152
      %p159 = scmp.eq.s32.totalorder %s17, 3
      %p160 = por %p158, %p159
      %p161 = scmp.ne.s32.totalorder %s153, %s156
      %p162 = scmp.eq.s32.totalorder %s17, 0
      %p163 = por %p161, %p162
      %p164 = scmp.ne.s32.totalorder %s153, %s156
      %p165 = scmp.eq.s32.totalorder %s22, 3
      %p166 = por %p164, %p165
      %p167 = scmp.ne.s32.totalorder %s156, %s157
      %p168 = scmp.eq.s32.totalorder %s22, 0
      %p169 = por %p167, %p168
      %p170 = scmp.ne.s32.totalorder %s156, %s157
      %p171 = scmp.eq.s32.totalorder %s23, 3
      %p172 = por %p170, %p171
      %p174 = scmp.ne.s32.totalorder %s157, %s173
      %p175 = scmp.eq.s32.totalorder %s23, 0
      %p176 = por %p174, %p175
      %s177 = ssub.s32 %s24, %s36
      %s178 = ssub.s32 %s25, %s32
      %s179 = sor.u32 %s177, %s178
      %p180 = scmp.eq.s32.totalorder %s179, 0
      %s182 = sadd.s32 %s181, 1
      %s183 = scalar_select %p180, %s181, %s182
      %p186 = pneg %p180
      %p187 = scmp.eq.s32.totalorder %s17, 3
      %p188 = por %p186, %p187
      %p189 = scmp.ne.s32.totalorder %s181, %s184
      %p190 = scmp.eq.s32.totalorder %s17, 0
      %p191 = por %p189, %p190
      %p192 = scmp.ne.s32.totalorder %s181, %s184
      %p193 = scmp.eq.s32.totalorder %s22, 3
      %p194 = por %p192, %p193
      %p195 = scmp.ne.s32.totalorder %s184, %s185
      %p196 = scmp.eq.s32.totalorder %s22, 0
      %p197 = por %p195, %p196
      %p198 = scmp.ne.s32.totalorder %s184, %s185
      %p199 = scmp.eq.s32.totalorder %s23, 3
      %p200 = por %p198, %p199
      %p202 = scmp.ne.s32.totalorder %s185, %s201
      %p203 = scmp.eq.s32.totalorder %s23, 0
      %p204 = por %p202, %p203
      %p205 = scmp.le.s32.totalorder 1, %s17
      %p206 = scmp.lt.s32.totalorder %s17, 5
      %p207 = pnand %p205, %p206
      %p208 = pneg %p207
      // Predicated region
      $region9: #{tpu_custom_call.1} parent=5 // pred_check
        _
      $region10: #{tpu_custom_call.1} parent=5 // pred_check_branch
        %210 = sbr.rel (%p207) target = $region12
      $region11: #{tpu_custom_call.1} parent=5 // pred_region
        %s211 = ssub.s32 %s17, 1
        // Predicated region
        $region13: #{tpu_custom_call.1} parent=11 // pred_check
          %p212 = pneg %p78
        $region14: #{tpu_custom_call.1} parent=11 // pred_check_branch
          %214 = sbr.rel (%p212) target = $region16
        $region15: #{tpu_custom_call.1} parent=11 // pred_region
          %s216 = ssub.s32 256, 256
          %217 = vsyncadd [#allocation5], %s216
          %s218 = sshll.u32 [#allocation4], 4
          %s219 = int_to_ptr.vmem [resolvable:$true] %s218
          %224 = dma.hbm_to_vmem [thread:$0]  %s1, 256, %s219, [#allocation5], 64, 64, 4
        $region16: #{tpu_custom_call.1} parent=11 // pred_fallthru
          _
        // Predicated region
        $region17: #{tpu_custom_call.1} parent=11 // pred_check
          %p225 = pneg %p99
        $region18: #{tpu_custom_call.1} parent=11 // pred_check_branch
          %227 = sbr.rel (%p225) target = $region20
        $region19: #{tpu_custom_call.1} parent=11 // pred_region
          _
        $region20: #{tpu_custom_call.1} parent=11 // pred_fallthru
          _
        // Predicated region
        $region21: #{tpu_custom_call.1} parent=11 // pred_check
          %p228 = pneg %p120
        $region22: #{tpu_custom_call.1} parent=11 // pred_check_branch
          %230 = sbr.rel (%p228) target = $region24
        $region23: #{tpu_custom_call.1} parent=11 // pred_region
          %s232 = ssub.s32 256, 256
          %233 = vsyncadd [#allocation5], %s232
          %s234 = sshll.u32 [#allocation6], 4
          %s235 = int_to_ptr.vmem [resolvable:$true] %s234
          %240 = dma.hbm_to_vmem [thread:$0]  %s3, 256, %s235, [#allocation5], 64, 64, 4
        $region24: #{tpu_custom_call.1} parent=11 // pred_fallthru
          _
        // Predicated region
        $region25: #{tpu_custom_call.1} parent=11 // pred_check
          %p241 = pneg %p141
        $region26: #{tpu_custom_call.1} parent=11 // pred_check_branch
          %243 = sbr.rel (%p241) target = $region28
        $region27: #{tpu_custom_call.1} parent=11 // pred_region
          _
        $region28: #{tpu_custom_call.1} parent=11 // pred_fallthru
          _
      $region12: #{tpu_custom_call.1} parent=5 // pred_fallthru
        _
      %p244 = scmp.lt.s32.totalorder %s17, 4
      // Predicated region
      $region29: #{tpu_custom_call.1} parent=5 // pred_check
        %p245 = pneg %p244
      $region30: #{tpu_custom_call.1} parent=5 // pred_check_branch
        %247 = sbr.rel (%p245) target = $region32
      $region31: #{tpu_custom_call.1} parent=5 // pred_region
        // Predicated region
        $region33: #{tpu_custom_call.1} parent=31 // pred_check
          %p248 = pneg %p51
        $region34: #{tpu_custom_call.1} parent=31 // pred_check_branch
          %250 = sbr.rel (%p248) target = $region36
        $region35: #{tpu_custom_call.1} parent=31 // pred_region
          %s251 = sand.u32 %s41, 1
          %s252 = scalar_lea.sflag [#allocation3], %s251
          %s253 = sand.u32 %s41, 1
          %s254 = smul.addr %s253, 8
          %s255 = scalar_lea.vmem [#allocation2], %s254
          %s256 = smul.u32 2, %s25
          %s258 = ssub.s32 128, 128
          %259 = vsyncadd %s252, %s258
          %s260 = smul.addr %s24, 4
          %s261 = sadd.s32 %s256, %s260
          %s262 = smul.addr %s261, 64
          %s263 = scalar_lea.hbm %s0, %s262
          %s264 = sshll.u32 %s255, 4
          %s265 = int_to_ptr.vmem [resolvable:$true] %s264
          %270 = dma.hbm_to_vmem [thread:$0]  %s263, 128, %s265, %s252, 64, 64, 4
        $region36: #{tpu_custom_call.1} parent=31 // pred_fallthru
          _
      $region32: #{tpu_custom_call.1} parent=5 // pred_fallthru
        _
      %p271 = scmp.le.s32.totalorder 1, %s17
      %p272 = scmp.lt.s32.totalorder %s17, 5
      %p273 = pnand %p271, %p272
      %p274 = pneg %p273
      // Predicated region
      $region37: #{tpu_custom_call.1} parent=5 // pred_check
        _
      $region38: #{tpu_custom_call.1} parent=5 // pred_check_branch
        %276 = sbr.rel (%p273) target = $region40
      $region39: #{tpu_custom_call.1} parent=5 // pred_region
        %s277 = ssub.s32 %s17, 1
        %s278 = sand.u32 %s44, 1
        %s279 = scalar_lea.sflag [#allocation3], %s278
        %s280 = sand.u32 %s44, 1
        %s281 = smul.addr %s280, 8
        %s282 = scalar_lea.vmem [#allocation2], %s281
        // Predicated region
        $region41: #{tpu_custom_call.1} parent=39 // pred_check
          %p283 = pneg %p57
        $region42: #{tpu_custom_call.1} parent=39 // pred_check_branch
          %285 = sbr.rel (%p283) target = $region44
        $region43: #{tpu_custom_call.1} parent=39 // pred_region
          %286 = dma.done %s279, 128
        $region44: #{tpu_custom_call.1} parent=39 // pred_fallthru
          _
        // Predicated region
        $region45: #{tpu_custom_call.1} parent=39 // pred_check
          %p287 = pneg %p78
        $region46: #{tpu_custom_call.1} parent=39 // pred_check_branch
          %289 = sbr.rel (%p287) target = $region48
        $region47: #{tpu_custom_call.1} parent=39 // pred_region
          %290 = dma.done [#allocation5], 256
        $region48: #{tpu_custom_call.1} parent=39 // pred_fallthru
          _
        // Predicated region
        $region49: #{tpu_custom_call.1} parent=39 // pred_check
          %p291 = pneg %p120
        $region50: #{tpu_custom_call.1} parent=39 // pred_check_branch
          %293 = sbr.rel (%p291) target = $region52
        $region51: #{tpu_custom_call.1} parent=39 // pred_region
          %294 = dma.done [#allocation5], 256
        $region52: #{tpu_custom_call.1} parent=39 // pred_fallthru
          _
        %s295 = sand.u32 %s44, 1
        %s296 = scalar_lea.sflag [#allocation3], %s295
        %s297 = sand.u32 %s44, 1
        %s298 = smul.addr %s297, 8
        %s299 = scalar_lea.vmem [#allocation2], %s298
        %p300 = pneg %p57
        %p301 = pneg %p54
        %p302 = pneg %p78
        %p303 = pneg %p75
        %p304 = pneg %p99
        %p305 = pneg %p96
        %p306 = pneg %p120
        %p307 = pneg %p117
        %p308 = pneg %p141
        %p309 = pneg %p138
        %p310 = pneg %p169
        %p311 = pneg %p166
        %s312 = sand.u32 %s156, 1
        %s313 = sand.u32 %s156, 1
        %s314 = smul.addr %s313, 32
        %s315 = scalar_lea.vmem [#allocation7], %s314
        %p316 = pneg %p197
        %p317 = pneg %p194
        %s318 = sand.u32 %s184, 1
        %s319 = sand.u32 %s184, 1
        %s320 = smul.addr %s319, 32
        %s321 = scalar_lea.vmem [#allocation8], %s320
        %s322 = smul.u32 2, %s27
        %s323 = smul.u32 2, %s27
        %s324 = smul.u32 2, %s27
        %v326 = vld [vmem:[%s282] sm:$0xf]
        %v327 = vld [vmem:[%s282 + $0x4] sm:$0xf]
        %v328 = vld [vmem:[#allocation4] sm:$0xf]
        %v329 = vld [vmem:[#allocation4 + $0x4] sm:$0xf]
        %v330 = vld [vmem:[#allocation4 + $0x8] sm:$0xf]
        %v331 = vld [vmem:[#allocation4 + $0xc] sm:$0xf]
        %v332 = vld [vmem:[%s2] sm:$0x1]
        %v334 = vlaneseq
        %v335 = vshrl.u32 %v334, 7
        %v336 = vsub.s32 0, %v335
        %v337 = vrot.slane %v332, %v336
        %v341 = vunpack.c.l.b16 %v326
        %v342 = vunpack.c.l.b16 %v327
        %v343 = vpack.c.b16 %v342, %v341
        %v348 = vunpack.c.l.b16 %v328
        %v349 = vunpack.c.l.b16 %v329
        %v350 = vunpack.c.l.b16 %v330
        %v351 = vunpack.c.l.b16 %v331
        %v352 = vpack.c.b16 %v349, %v348
        %v353 = vpack.c.b16 %v351, %v350
        %vm356 = vcmask 261120
        %v358 = vsel %vm356, %v343, 0
        %360 = vmatprep.subr.bf16.mxu0 0
        %361 = vmatpush1.bf16.msra.mxu0 %v352
        %362 = vmatprep.subr.bf16.mxu0 0
        %363 = vmatpush1.bf16.msra.mxu0 %v353
        %364 = vmatprep.subr.bf16.mxu0 0
        %365 = vmatpush1.bf16.msra.mxu0 0
        %366 = vmatprep.subr.bf16.mxu0 0
        %367 = vmatpush1.bf16.msra.mxu0 0
        %368 = vmatprep.subr.bf16.mxu0 0
        %369 = vmatpush1.bf16.msra.mxu0 0
        %370 = vmatprep.subr.bf16.mxu0 0
        %371 = vmatpush1.bf16.msra.mxu0 0
        %372 = vmatprep.subr.bf16.mxu0 0
        %373 = vmatpush1.bf16.msra.mxu0 0
        %374 = vmatprep.subr.bf16.mxu0 0
        %375 = vmatpush1.bf16.msra.mxu0 0
        %376 = vmatprep.subr.bf16.mxu0 0
        %377 = vmatpush1.bf16.msra.mxu0 0
        %378 = vmatprep.subr.bf16.mxu0 0
        %379 = vmatpush1.bf16.msra.mxu0 0
        %380 = vmatprep.subr.bf16.mxu0 0
        %381 = vmatpush1.bf16.msra.mxu0 0
        %382 = vmatprep.subr.bf16.mxu0 0
        %383 = vmatpush1.bf16.msra.mxu0 0
        %384 = vmatprep.subr.bf16.mxu0 0
        %385 = vmatpush1.bf16.msra.mxu0 0
        %386 = vmatprep.subr.bf16.mxu0 0
        %387 = vmatpush1.bf16.msra.mxu0 0
        %388 = vmatprep.subr.bf16.mxu0 0
        %389 = vmatpush1.bf16.msra.mxu0 0
        %390 = vmatprep.subr.bf16.mxu0 0
        %391 = vmatpush1.bf16.msra.mxu0 0
        %392 = vmatprep.mubr.bf16.mxu0 0
        %393 = vmatmul.mubr.bf16.gmra.mrb[0].mxu0 %v358
        %v394 = vpop.f32.mrb[0].mxu0
        %v395 = vadd.f32 %v337, %v394
        %v396 = vpop.f32.mrb[0].mxu0
        %v397 = vpop.f32.mrb[0].mxu0
        %v398 = vadd.f32 %v337, %v397
        %v399 = vpop.f32.mrb[0].mxu0
        %400 = vdwg.mxu0
        %v401 = vpack.c.bf16 %v398, %v395
        %v402 = vld [vmem:[#allocation6] sm:$0xf]
        %v403 = vld [vmem:[#allocation6 + $0x4] sm:$0xf]
        %v404 = vld [vmem:[#allocation6 + $0x8] sm:$0xf]
        %v405 = vld [vmem:[#allocation6 + $0xc] sm:$0xf]
        %v406 = vld [vmem:[%s4] sm:$0x1]
        %v408 = vlaneseq
        %v409 = vshrl.u32 %v408, 7
        %v410 = vsub.s32 0, %v409
        %v411 = vrot.slane %v406, %v410
        %v417 = vunpack.c.l.b16 %v402
        %v418 = vunpack.c.l.b16 %v403
        %v419 = vunpack.c.l.b16 %v404
        %v420 = vunpack.c.l.b16 %v405
        %v421 = vpack.c.b16 %v418, %v417
        %v422 = vpack.c.b16 %v420, %v419
        %425 = vmatprep.subr.bf16.mxu0 0
        %426 = vmatpush1.bf16.msra.mxu0 %v421
        %427 = vmatprep.subr.bf16.mxu0 0
        %428 = vmatpush1.bf16.msra.mxu0 %v422
        %429 = vmatprep.subr.bf16.mxu0 0
        %430 = vmatpush1.bf16.msra.mxu0 0
        %431 = vmatprep.subr.bf16.mxu0 0
        %432 = vmatpush1.bf16.msra.mxu0 0
        %433 = vmatprep.subr.bf16.mxu0 0
        %434 = vmatpush1.bf16.msra.mxu0 0
        %435 = vmatprep.subr.bf16.mxu0 0
        %436 = vmatpush1.bf16.msra.mxu0 0
        %437 = vmatprep.subr.bf16.mxu0 0
        %438 = vmatpush1.bf16.msra.mxu0 0
        %439 = vmatprep.subr.bf16.mxu0 0
        %440 = vmatpush1.bf16.msra.mxu0 0
        %441 = vmatprep.subr.bf16.mxu0 0
        %442 = vmatpush1.bf16.msra.mxu0 0
        %443 = vmatprep.subr.bf16.mxu0 0
        %444 = vmatpush1.bf16.msra.mxu0 0
        %445 = vmatprep.subr.bf16.mxu0 0
        %446 = vmatpush1.bf16.msra.mxu0 0
        %447 = vmatprep.subr.bf16.mxu0 0
        %448 = vmatpush1.bf16.msra.mxu0 0
        %449 = vmatprep.subr.bf16.mxu0 0
        %450 = vmatpush1.bf16.msra.mxu0 0
        %451 = vmatprep.subr.bf16.mxu0 0
        %452 = vmatpush1.bf16.msra.mxu0 0
        %453 = vmatprep.subr.bf16.mxu0 0
        %454 = vmatpush1.bf16.msra.mxu0 0
        %455 = vmatprep.subr.bf16.mxu0 0
        %456 = vmatpush1.bf16.msra.mxu0 0
        %457 = vmatprep.mubr.bf16.mxu0 0
        %458 = vmatmul.mubr.bf16.gmra.mrb[0].mxu0 %v358
        %v459 = vpop.f32.mrb[0].mxu0
        %v460 = vadd.f32 %v411, %v459
        %v461 = vpop.f32.mrb[0].mxu0
        %v462 = vpop.f32.mrb[0].mxu0
        %v463 = vadd.f32 %v411, %v462
        %v464 = vpop.f32.mrb[0].mxu0
        %465 = vdwg.mxu0
        %v466 = vpack.c.bf16 %v463, %v460
        %468 = vrot.lane.b32.xlu0 %v401, 120
        %v469 = vpop.permute.xlu0 %468
        %470 = vrot.lane.b32.xlu0 %v401, 112
        %v471 = vpop.permute.xlu0 %470
        %472 = vrot.lane.b32.xlu0 %v401, 104
        %v473 = vpop.permute.xlu0 %472
        %v476 = vpack.i.b16 %v469, %v401
        %v478 = vshrl.u32 %v401, 16
        %v479 = vshrl.u32 %v469, 16
        %v480 = vpack.i.b16 %v479, %v478
        %v484 = vpack.i.b16 %v473, %v471
        %v486 = vshrl.u32 %v471, 16
        %v487 = vshrl.u32 %v473, 16
        %v488 = vpack.i.b16 %v487, %v486
        %v491 = vpack.i.b16 0, 0
        %v493 = vshrl.u32 0, 16
        %v494 = vpack.i.b16 %v493, %v493
        %v496 = vcombine.high %v476, %v491
        %v498 = vunpack.c.l.s4 1983009808
        %v499 = vunpack.c.0.s8 %v498
        %v500 = vlaneseq
        %v501 = vshrl.u32 %v500, 7
        %v502 = vsub.s32 %v499, %v501
        %v503 = vrot.slane %v476, %v502
        %v505 = vunpack.c.l.s4 1983009808
        %v506 = vunpack.c.0.s8 %v505
        %v507 = vlaneseq
        %v508 = vshrl.u32 %v507, 7
        %v509 = vsub.s32 %v506, %v508
        %v510 = vrot.slane %v496, %v509
        %v511 = vcombine.high %v484, %v491
        %v513 = vunpack.c.l.s4 1983009808
        %v514 = vunpack.c.0.s8 %v513
        %v515 = vlaneseq
        %v516 = vshrl.u32 %v515, 7
        %v517 = vsub.s32 %v514, %v516
        %v518 = vrot.slane %v484, %v517
        %v520 = vunpack.c.l.s4 1983009808
        %v521 = vunpack.c.0.s8 %v520
        %v522 = vlaneseq
        %v523 = vshrl.u32 %v522, 7
        %v524 = vsub.s32 %v521, %v523
        %v525 = vrot.slane %v511, %v524
        %v526 = vcombine.low %v503, %v518
        %v527 = vcombine.high %v503, %v518
        %v529 = vunpack.c.l.s4 1934713408
        %v530 = vunpack.c.0.s8 %v529
        %v531 = vlaneseq
        %v532 = vshrl.u32 %v531, 7
        %v533 = vsub.s32 %v530, %v532
        %v534 = vrot.slane %v526, %v533
        %v536 = vunpack.c.l.s4 1934713408
        %v537 = vunpack.c.0.s8 %v536
        %v538 = vlaneseq
        %v539 = vshrl.u32 %v538, 7
        %v540 = vsub.s32 %v537, %v539
        %v541 = vrot.slane %v527, %v540
        %v542 = vcombine.low %v510, %v525
        %v543 = vcombine.high %v510, %v525
        %v545 = vunpack.c.l.s4 1934713408
        %v546 = vunpack.c.0.s8 %v545
        %v547 = vlaneseq
        %v548 = vshrl.u32 %v547, 7
        %v549 = vsub.s32 %v546, %v548
        %v550 = vrot.slane %v542, %v549
        %v552 = vunpack.c.l.s4 1934713408
        %v553 = vunpack.c.0.s8 %v552
        %v554 = vlaneseq
        %v555 = vshrl.u32 %v554, 7
        %v556 = vsub.s32 %v553, %v555
        %v557 = vrot.slane %v543, %v556
        %v558 = vcombine.high %v534, 0
        %v559 = vcombine.high %v541, 0
        %v560 = vcombine.high %v550, 0
        %v561 = vcombine.high %v557, 0
        %v562 = vcombine.high %v480, %v494
        %v564 = vunpack.c.l.s4 1983009808
        %v565 = vunpack.c.0.s8 %v564
        %v566 = vlaneseq
        %v567 = vshrl.u32 %v566, 7
        %v568 = vsub.s32 %v565, %v567
        %v569 = vrot.slane %v480, %v568
        %v571 = vunpack.c.l.s4 1983009808
        %v572 = vunpack.c.0.s8 %v571
        %v573 = vlaneseq
        %v574 = vshrl.u32 %v573, 7
        %v575 = vsub.s32 %v572, %v574
        %v576 = vrot.slane %v562, %v575
        %v577 = vcombine.high %v488, %v494
        %v579 = vunpack.c.l.s4 1983009808
        %v580 = vunpack.c.0.s8 %v579
        %v581 = vlaneseq
        %v582 = vshrl.u32 %v581, 7
        %v583 = vsub.s32 %v580, %v582
        %v584 = vrot.slane %v488, %v583
        %v586 = vunpack.c.l.s4 1983009808
        %v587 = vunpack.c.0.s8 %v586
        %v588 = vlaneseq
        %v589 = vshrl.u32 %v588, 7
        %v590 = vsub.s32 %v587, %v589
        %v591 = vrot.slane %v577, %v590
        %v592 = vcombine.low %v569, %v584
        %v593 = vcombine.high %v569, %v584
        %v595 = vunpack.c.l.s4 1934713408
        %v596 = vunpack.c.0.s8 %v595
        %v597 = vlaneseq
        %v598 = vshrl.u32 %v597, 7
        %v599 = vsub.s32 %v596, %v598
        %v600 = vrot.slane %v592, %v599
        %v602 = vunpack.c.l.s4 1934713408
        %v603 = vunpack.c.0.s8 %v602
        %v604 = vlaneseq
        %v605 = vshrl.u32 %v604, 7
        %v606 = vsub.s32 %v603, %v605
        %v607 = vrot.slane %v593, %v606
        %v608 = vcombine.low %v576, %v591
        %v609 = vcombine.high %v576, %v591
        %v611 = vunpack.c.l.s4 1934713408
        %v612 = vunpack.c.0.s8 %v611
        %v613 = vlaneseq
        %v614 = vshrl.u32 %v613, 7
        %v615 = vsub.s32 %v612, %v614
        %v616 = vrot.slane %v608, %v615
        %v618 = vunpack.c.l.s4 1934713408
        %v619 = vunpack.c.0.s8 %v618
        %v620 = vlaneseq
        %v621 = vshrl.u32 %v620, 7
        %v622 = vsub.s32 %v619, %v621
        %v623 = vrot.slane %v609, %v622
        %v624 = vcombine.high %v600, 0
        %v625 = vcombine.high %v607, 0
        %v626 = vcombine.high %v616, 0
        %v627 = vcombine.high %v623, 0
        %v628 = vcombine.low %v534, %v541
        %v630 = vunpack.c.l.s4 1983009808
        %v631 = vunpack.c.0.s8 %v630
        %v632 = vlaneseq
        %v633 = vshrl.u32 %v632, 7
        %v634 = vsub.s32 %v631, %v633
        %v635 = vrot.slane %v628, %v634
        %v636 = vcombine.low %v558, %v559
        %v638 = vunpack.c.l.s4 1983009808
        %v639 = vunpack.c.0.s8 %v638
        %v640 = vlaneseq
        %v641 = vshrl.u32 %v640, 7
        %v642 = vsub.s32 %v639, %v641
        %v643 = vrot.slane %v636, %v642
        %v644 = vcombine.low %v550, %v557
        %v646 = vunpack.c.l.s4 1983009808
        %v647 = vunpack.c.0.s8 %v646
        %v648 = vlaneseq
        %v649 = vshrl.u32 %v648, 7
        %v650 = vsub.s32 %v647, %v649
        %v651 = vrot.slane %v644, %v650
        %v652 = vcombine.low %v560, %v561
        %v654 = vunpack.c.l.s4 1983009808
        %v655 = vunpack.c.0.s8 %v654
        %v656 = vlaneseq
        %v657 = vshrl.u32 %v656, 7
        %v658 = vsub.s32 %v655, %v657
        %v659 = vrot.slane %v652, %v658
        %v660 = vcombine.low %v635, %v643
        %v662 = vunpack.c.l.s4 1934713408
        %v663 = vunpack.c.0.s8 %v662
        %v664 = vlaneseq
        %v665 = vshrl.u32 %v664, 7
        %v666 = vsub.s32 %v663, %v665
        %v667 = vrot.slane %v660, %v666
        %v668 = vcombine.low %v651, %v659
        %v670 = vunpack.c.l.s4 1934713408
        %v671 = vunpack.c.0.s8 %v670
        %v672 = vlaneseq
        %v673 = vshrl.u32 %v672, 7
        %v674 = vsub.s32 %v671, %v673
        %v675 = vrot.slane %v668, %v674
        %v676 = vcombine.low %v667, %v675
        %v677 = vcombine.high %v667, %v675
        %v678 = vcombine.low %v600, %v607
        %v680 = vunpack.c.l.s4 1983009808
        %v681 = vunpack.c.0.s8 %v680
        %v682 = vlaneseq
        %v683 = vshrl.u32 %v682, 7
        %v684 = vsub.s32 %v681, %v683
        %v685 = vrot.slane %v678, %v684
        %v686 = vcombine.low %v624, %v625
        %v688 = vunpack.c.l.s4 1983009808
        %v689 = vunpack.c.0.s8 %v688
        %v690 = vlaneseq
        %v691 = vshrl.u32 %v690, 7
        %v692 = vsub.s32 %v689, %v691
        %v693 = vrot.slane %v686, %v692
        %v694 = vcombine.low %v616, %v623
        %v696 = vunpack.c.l.s4 1983009808
        %v697 = vunpack.c.0.s8 %v696
        %v698 = vlaneseq
        %v699 = vshrl.u32 %v698, 7
        %v700 = vsub.s32 %v697, %v699
        %v701 = vrot.slane %v694, %v700
        %v702 = vcombine.low %v626, %v627
        %v704 = vunpack.c.l.s4 1983009808
        %v705 = vunpack.c.0.s8 %v704
        %v706 = vlaneseq
        %v707 = vshrl.u32 %v706, 7
        %v708 = vsub.s32 %v705, %v707
        %v709 = vrot.slane %v702, %v708
        %v710 = vcombine.low %v685, %v693
        %v712 = vunpack.c.l.s4 1934713408
        %v713 = vunpack.c.0.s8 %v712
        %v714 = vlaneseq
        %v715 = vshrl.u32 %v714, 7
        %v716 = vsub.s32 %v713, %v715
        %v717 = vrot.slane %v710, %v716
        %v718 = vcombine.low %v701, %v709
        %v720 = vunpack.c.l.s4 1934713408
        %v721 = vunpack.c.0.s8 %v720
        %v722 = vlaneseq
        %v723 = vshrl.u32 %v722, 7
        %v724 = vsub.s32 %v721, %v723
        %v725 = vrot.slane %v718, %v724
        %v726 = vcombine.low %v717, %v725
        %v727 = vcombine.high %v717, %v725
        %v730 = vpack.i.b16 %v726, %v676
        %v731 = vshrl.u32 %v676, 16
        %v732 = vshrl.u32 %v726, 16
        %v733 = vpack.i.b16 %v732, %v731
        %v736 = vpack.i.b16 %v727, %v677
        %v737 = vshrl.u32 %v677, 16
        %v738 = vshrl.u32 %v727, 16
        %v739 = vpack.i.b16 %v738, %v737
        %v740 = vunpack.c.l.b16 %v730
        %v741 = vunpack.c.h.b16 %v730
        %v742 = vunpack.c.l.b16 %v733
        %v743 = vunpack.c.h.b16 %v733
        %v744 = vunpack.c.l.b16 %v736
        %v745 = vunpack.c.h.b16 %v736
        %v746 = vunpack.c.l.b16 %v739
        %v747 = vunpack.c.h.b16 %v739
        %v748 = vpack.c.b16 %v740, %v740
        %v749 = vpack.c.b16 %v741, %v741
        %v750 = vpack.c.b16 %v742, %v742
        %v751 = vpack.c.b16 %v743, %v743
        %v752 = vpack.c.b16 %v744, %v744
        %v753 = vpack.c.b16 %v745, %v745
        %v754 = vpack.c.b16 %v746, %v746
        %v755 = vpack.c.b16 %v747, %v747
        %vm764 = vcmask 60416
        %765 = vst.msk [vmem:[%s315] sm:$0xf] %vm764, %v748
        %766 = vst.msk [vmem:[%s315 + $0x4] sm:$0xf] %vm764, %v749
        %767 = vst.msk [vmem:[%s315 + $0x8] sm:$0xf] %vm764, %v750
        %768 = vst.msk [vmem:[%s315 + $0xc] sm:$0xf] %vm764, %v751
        %769 = vst.msk [vmem:[%s315 + $0x10] sm:$0xf] %vm764, %v752
        %770 = vst.msk [vmem:[%s315 + $0x14] sm:$0xf] %vm764, %v753
        %771 = vst.msk [vmem:[%s315 + $0x18] sm:$0xf] %vm764, %v754
        %772 = vst.msk [vmem:[%s315 + $0x1c] sm:$0xf] %vm764, %v755
        %774 = vrot.lane.b32.xlu0 %v466, 120
        %v775 = vpop.permute.xlu0 %774
        %776 = vrot.lane.b32.xlu0 %v466, 112
        %v777 = vpop.permute.xlu0 %776
        %778 = vrot.lane.b32.xlu0 %v466, 104
        %v779 = vpop.permute.xlu0 %778
        %v782 = vpack.i.b16 %v775, %v466
        %v784 = vshrl.u32 %v466, 16
        %v785 = vshrl.u32 %v775, 16
        %v786 = vpack.i.b16 %v785, %v784
        %v790 = vpack.i.b16 %v779, %v777
        %v792 = vshrl.u32 %v777, 16
        %v793 = vshrl.u32 %v779, 16
        %v794 = vpack.i.b16 %v793, %v792
        %v796 = vcombine.high %v782, %v491
        %v798 = vunpack.c.l.s4 1983009808
        %v799 = vunpack.c.0.s8 %v798
        %v800 = vlaneseq
        %v801 = vshrl.u32 %v800, 7
        %v802 = vsub.s32 %v799, %v801
        %v803 = vrot.slane %v782, %v802
        %v805 = vunpack.c.l.s4 1983009808
        %v806 = vunpack.c.0.s8 %v805
        %v807 = vlaneseq
        %v808 = vshrl.u32 %v807, 7
        %v809 = vsub.s32 %v806, %v808
        %v810 = vrot.slane %v796, %v809
        %v811 = vcombine.high %v790, %v491
        %v813 = vunpack.c.l.s4 1983009808
        %v814 = vunpack.c.0.s8 %v813
        %v815 = vlaneseq
        %v816 = vshrl.u32 %v815, 7
        %v817 = vsub.s32 %v814, %v816
        %v818 = vrot.slane %v790, %v817
        %v820 = vunpack.c.l.s4 1983009808
        %v821 = vunpack.c.0.s8 %v820
        %v822 = vlaneseq
        %v823 = vshrl.u32 %v822, 7
        %v824 = vsub.s32 %v821, %v823
        %v825 = vrot.slane %v811, %v824
        %v826 = vcombine.low %v803, %v818
        %v827 = vcombine.high %v803, %v818
        %v829 = vunpack.c.l.s4 1934713408
        %v830 = vunpack.c.0.s8 %v829
        %v831 = vlaneseq
        %v832 = vshrl.u32 %v831, 7
        %v833 = vsub.s32 %v830, %v832
        %v834 = vrot.slane %v826, %v833
        %v836 = vunpack.c.l.s4 1934713408
        %v837 = vunpack.c.0.s8 %v836
        %v838 = vlaneseq
        %v839 = vshrl.u32 %v838, 7
        %v840 = vsub.s32 %v837, %v839
        %v841 = vrot.slane %v827, %v840
        %v842 = vcombine.low %v810, %v825
        %v843 = vcombine.high %v810, %v825
        %v845 = vunpack.c.l.s4 1934713408
        %v846 = vunpack.c.0.s8 %v845
        %v847 = vlaneseq
        %v848 = vshrl.u32 %v847, 7
        %v849 = vsub.s32 %v846, %v848
        %v850 = vrot.slane %v842, %v849
        %v852 = vunpack.c.l.s4 1934713408
        %v853 = vunpack.c.0.s8 %v852
        %v854 = vlaneseq
        %v855 = vshrl.u32 %v854, 7
        %v856 = vsub.s32 %v853, %v855
        %v857 = vrot.slane %v843, %v856
        %v858 = vcombine.high %v834, 0
        %v859 = vcombine.high %v841, 0
        %v860 = vcombine.high %v850, 0
        %v861 = vcombine.high %v857, 0
        %v862 = vcombine.high %v786, %v494
        %v864 = vunpack.c.l.s4 1983009808
        %v865 = vunpack.c.0.s8 %v864
        %v866 = vlaneseq
        %v867 = vshrl.u32 %v866, 7
        %v868 = vsub.s32 %v865, %v867
        %v869 = vrot.slane %v786, %v868
        %v871 = vunpack.c.l.s4 1983009808
        %v872 = vunpack.c.0.s8 %v871
        %v873 = vlaneseq
        %v874 = vshrl.u32 %v873, 7
        %v875 = vsub.s32 %v872, %v874
        %v876 = vrot.slane %v862, %v875
        %v877 = vcombine.high %v794, %v494
        %v879 = vunpack.c.l.s4 1983009808
        %v880 = vunpack.c.0.s8 %v879
        %v881 = vlaneseq
        %v882 = vshrl.u32 %v881, 7
        %v883 = vsub.s32 %v880, %v882
        %v884 = vrot.slane %v794, %v883
        %v886 = vunpack.c.l.s4 1983009808
        %v887 = vunpack.c.0.s8 %v886
        %v888 = vlaneseq
        %v889 = vshrl.u32 %v888, 7
        %v890 = vsub.s32 %v887, %v889
        %v891 = vrot.slane %v877, %v890
        %v892 = vcombine.low %v869, %v884
        %v893 = vcombine.high %v869, %v884
        %v895 = vunpack.c.l.s4 1934713408
        %v896 = vunpack.c.0.s8 %v895
        %v897 = vlaneseq
        %v898 = vshrl.u32 %v897, 7
        %v899 = vsub.s32 %v896, %v898
        %v900 = vrot.slane %v892, %v899
        %v902 = vunpack.c.l.s4 1934713408
        %v903 = vunpack.c.0.s8 %v902
        %v904 = vlaneseq
        %v905 = vshrl.u32 %v904, 7
        %v906 = vsub.s32 %v903, %v905
        %v907 = vrot.slane %v893, %v906
        %v908 = vcombine.low %v876, %v891
        %v909 = vcombine.high %v876, %v891
        %v911 = vunpack.c.l.s4 1934713408
        %v912 = vunpack.c.0.s8 %v911
        %v913 = vlaneseq
        %v914 = vshrl.u32 %v913, 7
        %v915 = vsub.s32 %v912, %v914
        %v916 = vrot.slane %v908, %v915
        %v918 = vunpack.c.l.s4 1934713408
        %v919 = vunpack.c.0.s8 %v918
        %v920 = vlaneseq
        %v921 = vshrl.u32 %v920, 7
        %v922 = vsub.s32 %v919, %v921
        %v923 = vrot.slane %v909, %v922
        %v924 = vcombine.high %v900, 0
        %v925 = vcombine.high %v907, 0
        %v926 = vcombine.high %v916, 0
        %v927 = vcombine.high %v923, 0
        %v928 = vcombine.low %v834, %v841
        %v930 = vunpack.c.l.s4 1983009808
        %v931 = vunpack.c.0.s8 %v930
        %v932 = vlaneseq
        %v933 = vshrl.u32 %v932, 7
        %v934 = vsub.s32 %v931, %v933
        %v935 = vrot.slane %v928, %v934
        %v936 = vcombine.low %v858, %v859
        %v938 = vunpack.c.l.s4 1983009808
        %v939 = vunpack.c.0.s8 %v938
        %v940 = vlaneseq
        %v941 = vshrl.u32 %v940, 7
        %v942 = vsub.s32 %v939, %v941
        %v943 = vrot.slane %v936, %v942
        %v944 = vcombine.low %v850, %v857
        %v946 = vunpack.c.l.s4 1983009808
        %v947 = vunpack.c.0.s8 %v946
        %v948 = vlaneseq
        %v949 = vshrl.u32 %v948, 7
        %v950 = vsub.s32 %v947, %v949
        %v951 = vrot.slane %v944, %v950
        %v952 = vcombine.low %v860, %v861
        %v954 = vunpack.c.l.s4 1983009808
        %v955 = vunpack.c.0.s8 %v954
        %v956 = vlaneseq
        %v957 = vshrl.u32 %v956, 7
        %v958 = vsub.s32 %v955, %v957
        %v959 = vrot.slane %v952, %v958
        %v960 = vcombine.low %v935, %v943
        %v962 = vunpack.c.l.s4 1934713408
        %v963 = vunpack.c.0.s8 %v962
        %v964 = vlaneseq
        %v965 = vshrl.u32 %v964, 7
        %v966 = vsub.s32 %v963, %v965
        %v967 = vrot.slane %v960, %v966
        %v968 = vcombine.low %v951, %v959
        %v970 = vunpack.c.l.s4 1934713408
        %v971 = vunpack.c.0.s8 %v970
        %v972 = vlaneseq
        %v973 = vshrl.u32 %v972, 7
        %v974 = vsub.s32 %v971, %v973
        %v975 = vrot.slane %v968, %v974
        %v976 = vcombine.low %v967, %v975
        %v977 = vcombine.high %v967, %v975
        %v978 = vcombine.low %v900, %v907
        %v980 = vunpack.c.l.s4 1983009808
        %v981 = vunpack.c.0.s8 %v980
        %v982 = vlaneseq
        %v983 = vshrl.u32 %v982, 7
        %v984 = vsub.s32 %v981, %v983
        %v985 = vrot.slane %v978, %v984
        %v986 = vcombine.low %v924, %v925
        %v988 = vunpack.c.l.s4 1983009808
        %v989 = vunpack.c.0.s8 %v988
        %v990 = vlaneseq
        %v991 = vshrl.u32 %v990, 7
        %v992 = vsub.s32 %v989, %v991
        %v993 = vrot.slane %v986, %v992
        %v994 = vcombine.low %v916, %v923
        %v996 = vunpack.c.l.s4 1983009808
        %v997 = vunpack.c.0.s8 %v996
        %v998 = vlaneseq
        %v999 = vshrl.u32 %v998, 7
        %v1000 = vsub.s32 %v997, %v999
        %v1001 = vrot.slane %v994, %v1000
        %v1002 = vcombine.low %v926, %v927
        %v1004 = vunpack.c.l.s4 1983009808
        %v1005 = vunpack.c.0.s8 %v1004
        %v1006 = vlaneseq
        %v1007 = vshrl.u32 %v1006, 7
        %v1008 = vsub.s32 %v1005, %v1007
        %v1009 = vrot.slane %v1002, %v1008
        %v1010 = vcombine.low %v985, %v993
        %v1012 = vunpack.c.l.s4 1934713408
        %v1013 = vunpack.c.0.s8 %v1012
        %v1014 = vlaneseq
        %v1015 = vshrl.u32 %v1014, 7
        %v1016 = vsub.s32 %v1013, %v1015
        %v1017 = vrot.slane %v1010, %v1016
        %v1018 = vcombine.low %v1001, %v1009
        %v1020 = vunpack.c.l.s4 1934713408
        %v1021 = vunpack.c.0.s8 %v1020
        %v1022 = vlaneseq
        %v1023 = vshrl.u32 %v1022, 7
        %v1024 = vsub.s32 %v1021, %v1023
        %v1025 = vrot.slane %v1018, %v1024
        %v1026 = vcombine.low %v1017, %v1025
        %v1027 = vcombine.high %v1017, %v1025
        %v1030 = vpack.i.b16 %v1026, %v976
        %v1031 = vshrl.u32 %v976, 16
        %v1032 = vshrl.u32 %v1026, 16
        %v1033 = vpack.i.b16 %v1032, %v1031
        %v1036 = vpack.i.b16 %v1027, %v977
        %v1037 = vshrl.u32 %v977, 16
        %v1038 = vshrl.u32 %v1027, 16
        %v1039 = vpack.i.b16 %v1038, %v1037
        %v1040 = vunpack.c.l.b16 %v1030
        %v1041 = vunpack.c.h.b16 %v1030
        %v1042 = vunpack.c.l.b16 %v1033
        %v1043 = vunpack.c.h.b16 %v1033
        %v1044 = vunpack.c.l.b16 %v1036
        %v1045 = vunpack.c.h.b16 %v1036
        %v1046 = vunpack.c.l.b16 %v1039
        %v1047 = vunpack.c.h.b16 %v1039
        %v1048 = vpack.c.b16 %v1040, %v1040
        %v1049 = vpack.c.b16 %v1041, %v1041
        %v1050 = vpack.c.b16 %v1042, %v1042
        %v1051 = vpack.c.b16 %v1043, %v1043
        %v1052 = vpack.c.b16 %v1044, %v1044
        %v1053 = vpack.c.b16 %v1045, %v1045
        %v1054 = vpack.c.b16 %v1046, %v1046
        %v1055 = vpack.c.b16 %v1047, %v1047
        %1064 = vst.msk [vmem:[%s321] sm:$0xf] %vm764, %v1048
        %1065 = vst.msk [vmem:[%s321 + $0x4] sm:$0xf] %vm764, %v1049
        %1066 = vst.msk [vmem:[%s321 + $0x8] sm:$0xf] %vm764, %v1050
        %1067 = vst.msk [vmem:[%s321 + $0xc] sm:$0xf] %vm764, %v1051
        %1068 = vst.msk [vmem:[%s321 + $0x10] sm:$0xf] %vm764, %v1052
        %1069 = vst.msk [vmem:[%s321 + $0x14] sm:$0xf] %vm764, %v1053
        %1070 = vst.msk [vmem:[%s321 + $0x18] sm:$0xf] %vm764, %v1054
        %1071 = vst.msk [vmem:[%s321 + $0x1c] sm:$0xf] %vm764, %v1055
        %s1072 = sand.u32 %s156, 1
        %s1073 = sand.u32 %s156, 1
        %s1074 = smul.addr %s1073, 32
        %s1075 = scalar_lea.vmem [#allocation7], %s1074
        %s1076 = sand.u32 %s184, 1
        %s1077 = sand.u32 %s184, 1
        %s1078 = smul.addr %s1077, 32
        %s1079 = scalar_lea.vmem [#allocation8], %s1078
        // Predicated region
        $region53: #{tpu_custom_call.1} parent=39 // pred_check
          %p1080 = pneg %p166
        $region54: #{tpu_custom_call.1} parent=39 // pred_check_branch
          %1082 = sbr.rel (%p1080) target = $region56
        $region55: #{tpu_custom_call.1} parent=39 // pred_region
          %s1083 = smul.u32 2, %s27
          %s1084 = smul.addr %s26, 16
          %s1085 = sadd.s32 %s1083, %s1084
          %s1086 = smul.addr %s1085, 4
          %s1087 = scalar_lea.vmem %s5, %s1086
          // Predicated region
          $region57: #{tpu_custom_call.1} parent=55 // pred_check
            _
          $region58: #{tpu_custom_call.1} parent=55 // pred_check_branch
            %1089 = sbr.rel (0) target = $region60
          $region59: #{tpu_custom_call.1} parent=55 // pred_region
            // Predicated region
            $region61: #{tpu_custom_call.1} parent=59 // pred_check
              _
            $region62: #{tpu_custom_call.1} parent=59 // pred_check_branch
              %1091 = sbr.rel target = $region64
            $region63: #{tpu_custom_call.1} parent=59 // pred_region
              // Predicated region
              $region76: #{tpu_custom_call.1} parent=63 // pred_check
                _
              $region77: #{tpu_custom_call.1} parent=63 // pred_check_branch
                %1120 = sbr.rel (0) target = $region79
              $region78: #{tpu_custom_call.1} parent=63 // pred_region
                loop: start=0, step=1, limit=1
                $region80: #{tpu_custom_call.1} parent=78 // loop_pre_header
                  _
                $region81: #{tpu_custom_call.1} parent=78 // loop_header
                  %s1122 = sphi 0, %s1126
                  %p1123 = scmp.ge.s32.totalorder %s1122, 1
                  %s1127 = sphi %s1075, %s1075
                  %s1128 = sphi %s1087, %s1087
                $region82: #{tpu_custom_call.1} parent=78 // loop_header_branch
                  %1125 = sbr.rel (%p1123) target = $region86
                $region83: #{tpu_custom_call.1} parent=78 // loop_body
                  _
                $region84: #{tpu_custom_call.1} parent=78 // loop_footer
                  %s1126 = sadd.s32 1, %s1122
                $region85: #{tpu_custom_call.1} parent=78 // loop_footer_branch
                  %1121 = sbr.rel target = $region81
                $region86: #{tpu_custom_call.1} parent=78 // loop_exit
                  _
                loop: start=0, step=1, limit=1
                $region87: #{tpu_custom_call.1} parent=78 // loop_pre_header
                  _
                $region88: #{tpu_custom_call.1} parent=78 // loop_header
                  %s1131 = sphi 0, %s1135
                  %p1132 = scmp.ge.s32.totalorder %s1131, 1
                  %s1136 = sphi %s1075, %s1075
                  %s1137 = sphi %s1087, %s1087
                $region89: #{tpu_custom_call.1} parent=78 // loop_header_branch
                  %1134 = sbr.rel (%p1132) target = $region93
                $region90: #{tpu_custom_call.1} parent=78 // loop_body
                  %v1138 = vld [vmem:[%s1136] sm:$0xf]
                  %1139 = vst [vmem:[%s1137] sm:$0xf] %v1138
                  %v1140 = vld [vmem:[%s1136 + $0x4] sm:$0xf]
                  %1141 = vst [vmem:[%s1137 + $0x4] sm:$0xf] %v1140
                  %v1142 = vld [vmem:[%s1136 + $0x8] sm:$0xf]
                  %1143 = vst [vmem:[%s1137 + $0x10] sm:$0xf] %v1142
                  %v1144 = vld [vmem:[%s1136 + $0xc] sm:$0xf]
                  %1145 = vst [vmem:[%s1137 + $0x14] sm:$0xf] %v1144
                  %v1146 = vld [vmem:[%s1136 + $0x10] sm:$0xf]
                  %1147 = vst [vmem:[%s1137 + $0x20] sm:$0xf] %v1146
                  %v1148 = vld [vmem:[%s1136 + $0x14] sm:$0xf]
                  %1149 = vst [vmem:[%s1137 + $0x24] sm:$0xf] %v1148
                  %v1150 = vld [vmem:[%s1136 + $0x18] sm:$0xf]
                  %1151 = vst [vmem:[%s1137 + $0x30] sm:$0xf] %v1150
                  %v1152 = vld [vmem:[%s1136 + $0x1c] sm:$0xf]
                  %1153 = vst [vmem:[%s1137 + $0x34] sm:$0xf] %v1152
                $region91: #{tpu_custom_call.1} parent=78 // loop_footer
                  %s1135 = sadd.s32 1, %s1131
                $region92: #{tpu_custom_call.1} parent=78 // loop_footer_branch
                  %1130 = sbr.rel target = $region88
                $region93: #{tpu_custom_call.1} parent=78 // loop_exit
                  _
              $region79: #{tpu_custom_call.1} parent=63 // pred_fallthru
                _
            $region64: #{tpu_custom_call.1} parent=59 // pred_fallthru
              _
            // Predicated region
            $region65: #{tpu_custom_call.1} parent=59 // pred_check
              _
            $region66: #{tpu_custom_call.1} parent=59 // pred_check_branch
              %1093 = sbr.rel (0) target = $region68
            $region67: #{tpu_custom_call.1} parent=59 // pred_region
              loop: start=0, step=1, limit=1
              $region69: #{tpu_custom_call.1} parent=67 // loop_pre_header
                _
              $region70: #{tpu_custom_call.1} parent=67 // loop_header
                %s1096 = sphi 0, %s1100
                %p1097 = scmp.ge.s32.totalorder %s1096, 1
                %s1101 = sphi %s1075, %s1075
                %s1102 = sphi %s1087, %s1087
              $region71: #{tpu_custom_call.1} parent=67 // loop_header_branch
                %1099 = sbr.rel (%p1097) target = $region75
              $region72: #{tpu_custom_call.1} parent=67 // loop_body
                %v1103 = vld [vmem:[%s1101] sm:$0xf]
                %1104 = vst [vmem:[%s1102] sm:$0xf] %v1103
                %v1105 = vld [vmem:[%s1101 + $0x4] sm:$0xf]
                %1106 = vst [vmem:[%s1102 + $0x4] sm:$0xf] %v1105
                %v1107 = vld [vmem:[%s1101 + $0x8] sm:$0xf]
                %1108 = vst [vmem:[%s1102 + $0x10] sm:$0xf] %v1107
                %v1109 = vld [vmem:[%s1101 + $0xc] sm:$0xf]
                %1110 = vst [vmem:[%s1102 + $0x14] sm:$0xf] %v1109
                %v1111 = vld [vmem:[%s1101 + $0x10] sm:$0xf]
                %1112 = vst [vmem:[%s1102 + $0x20] sm:$0xf] %v1111
                %v1113 = vld [vmem:[%s1101 + $0x14] sm:$0xf]
                %1114 = vst [vmem:[%s1102 + $0x24] sm:$0xf] %v1113
                %v1115 = vld [vmem:[%s1101 + $0x18] sm:$0xf]
                %1116 = vst [vmem:[%s1102 + $0x30] sm:$0xf] %v1115
                %v1117 = vld [vmem:[%s1101 + $0x1c] sm:$0xf]
                %1118 = vst [vmem:[%s1102 + $0x34] sm:$0xf] %v1117
              $region73: #{tpu_custom_call.1} parent=67 // loop_footer
                %s1100 = sadd.s32 1, %s1096
              $region74: #{tpu_custom_call.1} parent=67 // loop_footer_branch
                %1095 = sbr.rel target = $region70
              $region75: #{tpu_custom_call.1} parent=67 // loop_exit
                _
            $region68: #{tpu_custom_call.1} parent=59 // pred_fallthru
              _
          $region60: #{tpu_custom_call.1} parent=55 // pred_fallthru
            _
          %1154 = vnop
        $region56: #{tpu_custom_call.1} parent=39 // pred_fallthru
          _
        // Predicated region
        $region94: #{tpu_custom_call.1} parent=39 // pred_check
          %p1155 = pneg %p194
        $region95: #{tpu_custom_call.1} parent=39 // pred_check_branch
          %1157 = sbr.rel (%p1155) target = $region97
        $region96: #{tpu_custom_call.1} parent=39 // pred_region
          %s1158 = smul.u32 2, %s27
          %s1159 = smul.addr %s26, 16
          %s1160 = sadd.s32 %s1158, %s1159
          %s1161 = smul.addr %s1160, 4
          %s1162 = scalar_lea.vmem %s6, %s1161
          // Predicated region
          $region98: #{tpu_custom_call.1} parent=96 // pred_check
            _
          $region99: #{tpu_custom_call.1} parent=96 // pred_check_branch
            %1164 = sbr.rel (0) target = $region101
          $region100: #{tpu_custom_call.1} parent=96 // pred_region
            // Predicated region
            $region102: #{tpu_custom_call.1} parent=100 // pred_check
              _
            $region103: #{tpu_custom_call.1} parent=100 // pred_check_branch
              %1166 = sbr.rel target = $region105
            $region104: #{tpu_custom_call.1} parent=100 // pred_region
              // Predicated region
              $region117: #{tpu_custom_call.1} parent=104 // pred_check
                _
              $region118: #{tpu_custom_call.1} parent=104 // pred_check_branch
                %1195 = sbr.rel (0) target = $region120
              $region119: #{tpu_custom_call.1} parent=104 // pred_region
                loop: start=0, step=1, limit=1
                $region121: #{tpu_custom_call.1} parent=119 // loop_pre_header
                  _
                $region122: #{tpu_custom_call.1} parent=119 // loop_header
                  %s1197 = sphi 0, %s1201
                  %p1198 = scmp.ge.s32.totalorder %s1197, 1
                  %s1202 = sphi %s1079, %s1079
                  %s1203 = sphi %s1162, %s1162
                $region123: #{tpu_custom_call.1} parent=119 // loop_header_branch
                  %1200 = sbr.rel (%p1198) target = $region127
                $region124: #{tpu_custom_call.1} parent=119 // loop_body
                  _
                $region125: #{tpu_custom_call.1} parent=119 // loop_footer
                  %s1201 = sadd.s32 1, %s1197
                $region126: #{tpu_custom_call.1} parent=119 // loop_footer_branch
                  %1196 = sbr.rel target = $region122
                $region127: #{tpu_custom_call.1} parent=119 // loop_exit
                  _
                loop: start=0, step=1, limit=1
                $region128: #{tpu_custom_call.1} parent=119 // loop_pre_header
                  _
                $region129: #{tpu_custom_call.1} parent=119 // loop_header
                  %s1206 = sphi 0, %s1210
                  %p1207 = scmp.ge.s32.totalorder %s1206, 1
                  %s1211 = sphi %s1079, %s1079
                  %s1212 = sphi %s1162, %s1162
                $region130: #{tpu_custom_call.1} parent=119 // loop_header_branch
                  %1209 = sbr.rel (%p1207) target = $region134
                $region131: #{tpu_custom_call.1} parent=119 // loop_body
                  %v1213 = vld [vmem:[%s1211] sm:$0xf]
                  %1214 = vst [vmem:[%s1212] sm:$0xf] %v1213
                  %v1215 = vld [vmem:[%s1211 + $0x4] sm:$0xf]
                  %1216 = vst [vmem:[%s1212 + $0x4] sm:$0xf] %v1215
                  %v1217 = vld [vmem:[%s1211 + $0x8] sm:$0xf]
                  %1218 = vst [vmem:[%s1212 + $0x10] sm:$0xf] %v1217
                  %v1219 = vld [vmem:[%s1211 + $0xc] sm:$0xf]
                  %1220 = vst [vmem:[%s1212 + $0x14] sm:$0xf] %v1219
                  %v1221 = vld [vmem:[%s1211 + $0x10] sm:$0xf]
                  %1222 = vst [vmem:[%s1212 + $0x20] sm:$0xf] %v1221
                  %v1223 = vld [vmem:[%s1211 + $0x14] sm:$0xf]
                  %1224 = vst [vmem:[%s1212 + $0x24] sm:$0xf] %v1223
                  %v1225 = vld [vmem:[%s1211 + $0x18] sm:$0xf]
                  %1226 = vst [vmem:[%s1212 + $0x30] sm:$0xf] %v1225
                  %v1227 = vld [vmem:[%s1211 + $0x1c] sm:$0xf]
                  %1228 = vst [vmem:[%s1212 + $0x34] sm:$0xf] %v1227
                $region132: #{tpu_custom_call.1} parent=119 // loop_footer
                  %s1210 = sadd.s32 1, %s1206
                $region133: #{tpu_custom_call.1} parent=119 // loop_footer_branch
                  %1205 = sbr.rel target = $region129
                $region134: #{tpu_custom_call.1} parent=119 // loop_exit
                  _
              $region120: #{tpu_custom_call.1} parent=104 // pred_fallthru
                _
            $region105: #{tpu_custom_call.1} parent=100 // pred_fallthru
              _
            // Predicated region
            $region106: #{tpu_custom_call.1} parent=100 // pred_check
              _
            $region107: #{tpu_custom_call.1} parent=100 // pred_check_branch
              %1168 = sbr.rel (0) target = $region109
            $region108: #{tpu_custom_call.1} parent=100 // pred_region
              loop: start=0, step=1, limit=1
              $region110: #{tpu_custom_call.1} parent=108 // loop_pre_header
                _
              $region111: #{tpu_custom_call.1} parent=108 // loop_header
                %s1171 = sphi 0, %s1175
                %p1172 = scmp.ge.s32.totalorder %s1171, 1
                %s1176 = sphi %s1079, %s1079
                %s1177 = sphi %s1162, %s1162
              $region112: #{tpu_custom_call.1} parent=108 // loop_header_branch
                %1174 = sbr.rel (%p1172) target = $region116
              $region113: #{tpu_custom_call.1} parent=108 // loop_body
                %v1178 = vld [vmem:[%s1176] sm:$0xf]
                %1179 = vst [vmem:[%s1177] sm:$0xf] %v1178
                %v1180 = vld [vmem:[%s1176 + $0x4] sm:$0xf]
                %1181 = vst [vmem:[%s1177 + $0x4] sm:$0xf] %v1180
                %v1182 = vld [vmem:[%s1176 + $0x8] sm:$0xf]
                %1183 = vst [vmem:[%s1177 + $0x10] sm:$0xf] %v1182
                %v1184 = vld [vmem:[%s1176 + $0xc] sm:$0xf]
                %1185 = vst [vmem:[%s1177 + $0x14] sm:$0xf] %v1184
                %v1186 = vld [vmem:[%s1176 + $0x10] sm:$0xf]
                %1187 = vst [vmem:[%s1177 + $0x20] sm:$0xf] %v1186
                %v1188 = vld [vmem:[%s1176 + $0x14] sm:$0xf]
                %1189 = vst [vmem:[%s1177 + $0x24] sm:$0xf] %v1188
                %v1190 = vld [vmem:[%s1176 + $0x18] sm:$0xf]
                %1191 = vst [vmem:[%s1177 + $0x30] sm:$0xf] %v1190
                %v1192 = vld [vmem:[%s1176 + $0x1c] sm:$0xf]
                %1193 = vst [vmem:[%s1177 + $0x34] sm:$0xf] %v1192
              $region114: #{tpu_custom_call.1} parent=108 // loop_footer
                %s1175 = sadd.s32 1, %s1171
              $region115: #{tpu_custom_call.1} parent=108 // loop_footer_branch
                %1170 = sbr.rel target = $region111
              $region116: #{tpu_custom_call.1} parent=108 // loop_exit
                _
            $region109: #{tpu_custom_call.1} parent=100 // pred_fallthru
              _
          $region101: #{tpu_custom_call.1} parent=96 // pred_fallthru
            _
          %1229 = vnop
        $region97: #{tpu_custom_call.1} parent=39 // pred_fallthru
          _
      $region40: #{tpu_custom_call.1} parent=5 // pred_fallthru
        _
      %p1230 = scmp.le.s32.totalorder 2, %s17
      // Predicated region
      $region135: #{tpu_custom_call.1} parent=5 // pred_check
        %p1231 = pneg %p1230
      $region136: #{tpu_custom_call.1} parent=5 // pred_check_branch
        %1233 = sbr.rel (%p1231) target = $region138
      $region137: #{tpu_custom_call.1} parent=5 // pred_region
        %s1234 = ssub.s32 %s17, 2
        // Predicated region
        $region139: #{tpu_custom_call.1} parent=137 // pred_check
          %p1235 = pneg %p172
        $region140: #{tpu_custom_call.1} parent=137 // pred_check_branch
          %1237 = sbr.rel (%p1235) target = $region142
        $region141: #{tpu_custom_call.1} parent=137 // pred_region
          %s1238 = sand.u32 %s157, 1
          %s1239 = sand.u32 %s157, 1
          %s1240 = smul.addr %s1239, 32
          %s1241 = scalar_lea.vmem [#allocation7], %s1240
        $region142: #{tpu_custom_call.1} parent=137 // pred_fallthru
          _
        // Predicated region
        $region143: #{tpu_custom_call.1} parent=137 // pred_check
          %p1242 = pneg %p200
        $region144: #{tpu_custom_call.1} parent=137 // pred_check_branch
          %1244 = sbr.rel (%p1242) target = $region146
        $region145: #{tpu_custom_call.1} parent=137 // pred_region
          %s1245 = sand.u32 %s185, 1
          %s1246 = sand.u32 %s185, 1
          %s1247 = smul.addr %s1246, 32
          %s1248 = scalar_lea.vmem [#allocation8], %s1247
        $region146: #{tpu_custom_call.1} parent=137 // pred_fallthru
          _
      $region138: #{tpu_custom_call.1} parent=5 // pred_fallthru
        _
    $region6: #{tpu_custom_call.1} parent=1 // loop_footer
      %s21 = sadd.s32 1, %s17
    $region7: #{tpu_custom_call.1} parent=1 // loop_footer_branch
      %16 = sbr.rel target = $region3
    $region8: #{tpu_custom_call.1} parent=1 // loop_exit
      _
    %1249 = vsyncpa [#allocation3], 1
    %s1250 = scalar_lea.sflag [#allocation3], 1
    %1251 = vsyncpa %s1250, 1
    %1252 = vsyncpa [#allocation5], 1

</llo_original>
